<compile_context>
chip_gen: v5e
topology: v5e:2x2
jax: 0.10.0
libtpu: 0.0.40
codegen_flags: <defaults>
</compile_context>

<pallas_src>
import functools

import jax
import jax.numpy as jnp
from jax.experimental import pallas as pl
from jax.experimental.pallas import tpu as pltpu

LN_EPS = 1e-5   # PyTorch nn.LayerNorm default eps
LANE = 128


def _round_up(n, m):
    return ((n + m - 1) // m) * m


# Probe once whether this jax supports single-buffered BlockSpecs.
try:
    pl.BlockSpec((8, 128), lambda: (0, 0), pipeline_mode=pl.Buffered(1))
    _SINGLE_BUFFER_WEIGHTS = True
except Exception:  # pragma: no cover - older jax without pipeline_mode
    _SINGLE_BUFFER_WEIGHTS = False


def _vmem_capacity_bytes():
    """Physical VMEM per TensorCore; conservative fallback if unknown."""
    try:
        cap = getattr(pltpu.get_tpu_info(), "vmem_capacity_bytes", None)
        if cap:
            return int(cap)
    except Exception:
        pass
    return 64 << 20          # v7x per-TC VMEM (smallest across generations)


def _const_spec(shape):
    """Grid-invariant block: constant index_map, single-buffered (weights stay resident)."""
    idx = lambda *_: (0,) * len(shape)
    if _SINGLE_BUFFER_WEIGHTS:
        return pl.BlockSpec(shape, idx, pipeline_mode=pl.Buffered(1))
    return pl.BlockSpec(shape, idx)


def _layernorm(o, hidden, lane_mask, ln_g, ln_b):
    """Two-pass LayerNorm over the true hidden width.

    Padded lanes of `o` are exactly 0 (weights/biases are zero-padded), so the mean is
    exact; the centered value is lane-masked before the variance sum, and padded beta=0
    keeps padded lanes of the result exactly 0 for the next matmul.
    """
    inv_h = jnp.float32(1.0 / hidden)
    mu = jnp.sum(o, axis=-1, keepdims=True) * inv_h
    c = o - mu
    if lane_mask is not None:
        c = jnp.where(lane_mask, c, 0.0)
    var = jnp.sum(c * c, axis=-1, keepdims=True) * inv_h
    return c * jax.lax.rsqrt(var + LN_EPS) * ln_g + ln_b


# --------------------------- kernel 1: VMEM-resident weights ---------------------------

def jrngc_resident_kernel(layers, hidden, use_relu,
                          x_ref, w_in_ref, b_in_ref,
                          w_cat_ref, b_cat_ref, w2_ref, b2_ref,
                          ln_g_ref, ln_b_ref, w_out_ref, b_out_ref,
                          o_ref):
    hp = w2_ref.shape[-1]                       # lane-padded hidden width
    lane_mask = None
    if hp != hidden:
        lane_mask = jax.lax.broadcasted_iota(jnp.int32, (1, hp), 1) < hidden

    # input gate (weight-normed weight pre-materialized + padded + bf16 in wrapper)
    h = (jnp.dot(x_ref[...], w_in_ref[...], preferred_element_type=jnp.float32)
         + b_in_ref[...])
    if use_relu:
        h = jnp.maximum(h, 0.0)

    # residual encoder stack (unrolled; large layer counts use the streaming kernel,
    # whose layer grid axis bounds live ranges instead).
    for l in range(layers):
        hb = h.astype(jnp.bfloat16)
        # fused: [w1 | w_res] in one MXU pass over shared LHS h
        z = (jnp.dot(hb, w_cat_ref[l], preferred_element_type=jnp.float32)
             + b_cat_ref[l:l + 1, :])
        t = jnp.maximum(z[:, :hp], 0.0)                         # ReLU(linear_1(h))
        res = z[:, hp:]                                         # linear_res(h)
        t = (jnp.dot(t.astype(jnp.bfloat16), w2_ref[l],
                     preferred_element_type=jnp.float32) + b2_ref[l:l + 1, :])
        # TODO(synk): nn.Dropout is identity in eval/inference mode; no RNG mask here.
        h = _layernorm(t + res, hidden, lane_mask,
                       ln_g_ref[l:l + 1, :], ln_b_ref[l:l + 1, :])

    # output gate (lane-dense padded output slab; wrapper slices back to d)
    o_ref[...] = (jnp.dot(h.astype(jnp.bfloat16), w_out_ref[...],
                          preferred_element_type=jnp.float32) + b_out_ref[...])


# ------------------------ kernel 2: per-layer weight streaming -------------------------

def jrngc_stream_kernel(hidden, use_relu,
                        x_ref, w_in_ref, b_in_ref,
                        w_cat_ref, b_cat_ref, w2_ref, b2_ref,
                        ln_g_ref, ln_b_ref, w_out_ref, b_out_ref,
                        o_ref, h_ref):
    hp = w2_ref.shape[-1]
    l = pl.program_id(1)
    lane_mask = None
    if hp != hidden:
        lane_mask = jax.lax.broadcasted_iota(jnp.int32, (1, hp), 1) < hidden

    @pl.when(l == 0)
    def _():
        h0 = (jnp.dot(x_ref[...], w_in_ref[...], preferred_element_type=jnp.float32)
              + b_in_ref[...])
        if use_relu:
            h0 = jnp.maximum(h0, 0.0)
        h_ref[...] = h0

    hb = h_ref[...].astype(jnp.bfloat16)
    z = jnp.dot(hb, w_cat_ref[0], preferred_element_type=jnp.float32) + b_cat_ref[0]
    t = jnp.maximum(z[:, :hp], 0.0)
    res = z[:, hp:]
    t = (jnp.dot(t.astype(jnp.bfloat16), w2_ref[0],
                 preferred_element_type=jnp.float32) + b2_ref[0])
    # TODO(synk): nn.Dropout is identity in eval/inference mode; no RNG mask here.
    h_ref[...] = _layernorm(t + res, hidden, lane_mask, ln_g_ref[0], ln_b_ref[0])

    @pl.when(l == pl.num_programs(1) - 1)
    def _():
        o_ref[...] = (jnp.dot(h_ref[...].astype(jnp.bfloat16), w_out_ref[...],
                              preferred_element_type=jnp.float32) + b_out_ref[...])


# ----------------------------------- host wrapper --------------------------------------

def weight_norm_effective(v_t, g):
    """PyTorch weight_norm (dim=0 over [out, in] weight) in transposed [in, out] layout."""
    norm = jnp.sqrt(jnp.sum(v_t * v_t, axis=0, keepdims=True))   # per-output-column norm
    return v_t * (g[None, :] / norm)


def init_params(key, d, lag, layers, hidden):
    ks = jax.random.split(key, 12)
    s = 0.1
    p = {}
    # inputgate (weight-normed): raw direction v and gain g
    p["w_in_v"] = jax.random.normal(ks[0], (d * lag, hidden), jnp.float32) * s
    p["g_in"] = jax.random.uniform(ks[1], (hidden,), jnp.float32, 0.5, 1.5)
    p["b_in"] = jax.random.normal(ks[2], (hidden,), jnp.float32) * s
    # residual blocks (stacked along the leading "layer" axis)
    p["w1_v"] = jax.random.normal(ks[3], (layers, hidden, hidden), jnp.float32) * s
    p["g1"] = jax.random.uniform(ks[4], (layers, hidden), jnp.float32, 0.5, 1.5)
    p["b1"] = jax.random.normal(ks[5], (layers, hidden), jnp.float32) * s
    p["w2"] = jax.random.normal(ks[6], (layers, hidden, hidden), jnp.float32) * s
    p["b2"] = jax.random.normal(ks[7], (layers, hidden), jnp.float32) * s
    p["wres"] = jax.random.normal(ks[8], (layers, hidden, hidden), jnp.float32) * s
    p["bres"] = jax.random.normal(ks[9], (layers, hidden), jnp.float32) * s
    p["ln_g"] = jnp.ones((layers, hidden), jnp.float32)
    p["ln_b"] = jnp.zeros((layers, hidden), jnp.float32)
    # outputgate
    p["w_out"] = jax.random.normal(ks[10], (hidden, d), jnp.float32) * s
    p["b_out"] = jax.random.normal(ks[11], (d,), jnp.float32) * s
    return p


def jrngc_forward(x, params, *, layers, relu=False, block_b=512, stream_layers=None):
    """x: [batch, d, lag]  ->  [batch, d] float32."""
    B, d, lag = x.shape
    hidden = params["b_in"].shape[-1]
    dl = d * lag
    HP = _round_up(hidden, LANE)
    DP = _round_up(d, LANE)

    # --- parameter glue (not the hot path): weight-norm, pad to lane-dense, bf16 ---
    w_in = weight_norm_effective(params["w_in_v"], params["g_in"])        # [dl, hidden]
    w1 = jax.vmap(weight_norm_effective)(params["w1_v"], params["g1"])    # [L, h, h]

    def padw2(a, c):      # pad last dim of a 2-D array
        return jnp.pad(a, ((0, 0), (0, c - a.shape[-1])))

    def padw3(a, r, c):   # pad last two dims of stacked [L, ., .] weights
        return jnp.pad(a, ((0, 0), (0, r - a.shape[1]), (0, c - a.shape[2])))

    w_in_p = padw2(w_in, HP).astype(jnp.bfloat16)                         # [dl, HP]
    b_in_p = jnp.pad(params["b_in"], (0, HP - hidden))[None, :]           # [1, HP]
    w_cat = jnp.concatenate([padw3(w1, HP, HP), padw3(params["wres"], HP, HP)],
                            axis=-1).astype(jnp.bfloat16)                 # [L, HP, 2HP]
    b_cat = jnp.concatenate([padw2(params["b1"], HP), padw2(params["bres"], HP)],
                            axis=-1)                                      # [L, 2HP]
    w2_p = padw3(params["w2"], HP, HP).astype(jnp.bfloat16)               # [L, HP, HP]
    b2_p = padw2(params["b2"], HP)                                        # [L, HP]
    ln_g_p = padw2(params["ln_g"], HP)                                    # [L, HP]
    ln_b_p = padw2(params["ln_b"], HP)     # padded beta must stay 0 (keeps pad lanes 0)
    w_out_p = jnp.pad(params["w_out"], ((0, HP - hidden), (0, DP - d))).astype(jnp.bfloat16)
    b_out_p = jnp.pad(params["b_out"], (0, DP - d))[None, :]              # [1, DP]

    weight_args = (w_in_p, b_in_p, w_cat, b_cat, w2_p, b2_p,
                   ln_g_p, ln_b_p, w_out_p, b_out_p)
    weight_bytes = sum(int(a.size) * a.dtype.itemsize for a in weight_args)
    wmult = 1 if _SINGLE_BUFFER_WEIGHTS else 2

    # --- x path: bf16, no feature/batch padding (edge tiles handled by Pallas) ---
    x_flat = x.reshape(B, dl).astype(jnp.bfloat16)

    # --- batch tiling: balance tiles; >=2 grid steps when the batch allows, so both
    #     v7x TensorCores get work and the x/out tile DMAs overlap compute. ---
    n_steps = max(pl.cdiv(B, block_b), 2 if B >= 16 else 1)
    TB = min(_round_up(pl.cdiv(B, n_steps), 8), _round_up(B, 8))
    nb = pl.cdiv(B, TB)

    if stream_layers is None:
        # stream per-layer weights when the resident stack would crowd v7x's 64 MiB VMEM,
        # or when the unrolled layer loop would inflate code size / vreg pressure.
        stream_layers = (weight_bytes * wmult > (40 << 20)) or (layers >= 8)

    vmem_cap = _vmem_capacity_bytes()
    cost = pl.CostEstimate(
        flops=int(2 * B * (dl * HP + layers * 3 * HP * HP + HP * DP)),
        transcendentals=int(B * layers),
        bytes_accessed=int(weight_bytes + B * dl * 2 + B * DP * 4))

    if not stream_layers:
        # ---------------- fully VMEM-resident weights ----------------
        in_specs = [pl.BlockSpec((TB, dl), lambda i: (i, 0))]     # x tile (pipelined)
        in_specs += [_const_spec(a.shape) for a in weight_args]   # resident weights
        out_specs = pl.BlockSpec((TB, DP), lambda i: (i, 0))

        io_bytes = 2 * (TB * dl * 2 + TB * DP * 4)                # double-buffered tiles
        act_bytes = 8 * TB * HP * 4                               # live-activation headroom
        needed = weight_bytes * wmult + io_bytes + act_bytes + (4 << 20)
        vmem_limit = int(min(max(needed, 32 << 20), (vmem_cap * 85) // 100))

        out_p = pl.pallas_call(
            functools.partial(jrngc_resident_kernel, layers, hidden, relu),
            out_shape=jax.ShapeDtypeStruct((B, DP), jnp.float32),
            grid=(nb,),
            in_specs=in_specs,
            out_specs=out_specs,
            compiler_params=pltpu.CompilerParams(
                dimension_semantics=("parallel",),
                vmem_limit_bytes=vmem_limit),
            cost_estimate=cost,
        )(x_flat, *weight_args)
    else:
        # -------- per-layer weight streaming: grid = (batch tiles, layers) --------
        # Keep TB large (>= ~384 on v7x, ~256 v5e, ~640 v6e) so the ~6*HP^2*2-byte
        # per-layer weight DMA hides under the ~6*TB*HP^2 MXU flops; block_b=512 default.
        b_cat3 = b_cat[:, None, :]       # [L, 1, 2HP]
        b2_3 = b2_p[:, None, :]          # [L, 1, HP]
        ln_g3 = ln_g_p[:, None, :]
        ln_b3 = ln_b_p[:, None, :]

        in_specs = [
            pl.BlockSpec((TB, dl), lambda b, l: (b, 0)),             # x (per batch tile)
            _const_spec(w_in_p.shape), _const_spec(b_in_p.shape),    # input gate, resident
            pl.BlockSpec((1, HP, 2 * HP), lambda b, l: (l, 0, 0)),   # w_cat[l] (streamed)
            pl.BlockSpec((1, 1, 2 * HP), lambda b, l: (l, 0, 0)),    # b_cat[l]
            pl.BlockSpec((1, HP, HP), lambda b, l: (l, 0, 0)),       # w2[l]
            pl.BlockSpec((1, 1, HP), lambda b, l: (l, 0, 0)),        # b2[l]
            pl.BlockSpec((1, 1, HP), lambda b, l: (l, 0, 0)),        # ln_g[l]
            pl.BlockSpec((1, 1, HP), lambda b, l: (l, 0, 0)),        # ln_b[l]
            _const_spec(w_out_p.shape), _const_spec(b_out_p.shape),  # output gate, resident
        ]
        out_specs = pl.BlockSpec((TB, DP), lambda b, l: (b, 0))

        gate_bytes = sum(int(a.size) * a.dtype.itemsize
                         for a in (w_in_p, b_in_p, w_out_p, b_out_p)) * wmult
        per_layer_bytes = (HP * 2 * HP * 2 + HP * HP * 2 + 2 * HP * 4 + 3 * HP * 4)
        io_bytes = 2 * (TB * dl * 2 + TB * DP * 4)
        act_bytes = TB * HP * 4 + 8 * TB * HP * 4                 # h scratch + headroom
        needed = gate_bytes + 2 * per_layer_bytes + io_bytes + act_bytes + (4 << 20)
        vmem_limit = int(min(max(needed, 32 << 20), (vmem_cap * 85) // 100))

        out_p = pl.pallas_call(
            functools.partial(jrngc_stream_kernel, hidden, relu),
            out_shape=jax.ShapeDtypeStruct((B, DP), jnp.float32),
            grid=(nb, layers),
            in_specs=in_specs,
            out_specs=out_specs,
            scratch_shapes=[pltpu.VMEM((TB, HP), jnp.float32)],    # carried activation h
            compiler_params=pltpu.CompilerParams(
                dimension_semantics=("parallel", "arbitrary"),
                vmem_limit_bytes=vmem_limit),
            cost_estimate=cost,
        )(x_flat, w_in_p, b_in_p, w_cat, b_cat3, w2_p, b2_3, ln_g3, ln_b3,
          w_out_p, b_out_p)

    return out_p[:, :d]


def jrngc_reference(x, params, *, layers, relu=False):
    """Pure-JAX reference with matching numerics (bf16 weights/LHS, f32 accumulate)."""
    B, d, lag = x.shape
    h = x.reshape(B, d * lag).astype(jnp.float32)

    def bdot(a, w):
        return jnp.dot(a.astype(jnp.bfloat16), w.astype(jnp.bfloat16),
                       preferred_element_type=jnp.float32)

    w_in = weight_norm_effective(params["w_in_v"], params["g_in"])
    h = bdot(h, w_in) + params["b_in"]
    if relu:
        h = jnp.maximum(h, 0.0)
    for l in range(layers):
        w1 = weight_norm_effective(params["w1_v"][l], params["g1"][l])
        t = jnp.maximum(bdot(h, w1) + params["b1"][l], 0.0)
        t = bdot(t, params["w2"][l]) + params["b2"][l]
        res = bdot(h, params["wres"][l]) + params["bres"][l]
        o = t + res
        mu = jnp.mean(o, axis=-1, keepdims=True)
        var = jnp.mean((o - mu) ** 2, axis=-1, keepdims=True)
        h = (o - mu) / jnp.sqrt(var + LN_EPS) * params["ln_g"][l] + params["ln_b"][l]
    return bdot(h, params["w_out"]) + params["b_out"]


if __name__ == "__main__":
    # small, module-consistent shapes: batch=2, d=4, lag=8, hidden=32, layers=2
    B, D, LAG, HIDDEN, LAYERS = 2, 4, 8, 32, 2
    key = jax.random.PRNGKey(0)
    kx, kp = jax.random.split(key)

    x = jax.random.normal(kx, (B, D, LAG), jnp.float32)
    params = init_params(kp, D, LAG, LAYERS, HIDDEN)
    y_ref = jrngc_reference(x, params, layers=LAYERS, relu=False)

    # resident-weights path (auto-selected for this small config)
    y = jax.block_until_ready(jrngc_forward(x, params, layers=LAYERS, relu=False))
    assert y.shape == (B, D)
    assert jnp.allclose(y, y_ref, atol=2e-3, rtol=2e-3), "resident path mismatch"

    # layer-streaming path (what large hidden/layer configs auto-select on v7x)
    y_s = jax.block_until_ready(
        jrngc_forward(x, params, layers=LAYERS, relu=False, stream_layers=True))
    assert y_s.shape == (B, D)
    assert jnp.allclose(y_s, y_ref, atol=2e-3, rtol=2e-3), "streaming path mismatch"

    print("KERNEL_OK")
</pallas_src>

<mosaic_0001>
module attributes {stable_mosaic.version = 11 : i64} {
  func.func @jrngc_resident_kernel(%arg0: i32, %arg1: memref<8x32xbf16, #tpu.memory_space<vmem>>, %arg2: memref<32x128xbf16, #tpu.memory_space<vmem>>, %arg3: memref<1x128xf32, #tpu.memory_space<vmem>>, %arg4: memref<2x128x256xbf16, #tpu.memory_space<vmem>>, %arg5: memref<2x256xf32, #tpu.memory_space<vmem>>, %arg6: memref<2x128x128xbf16, #tpu.memory_space<vmem>>, %arg7: memref<2x128xf32, #tpu.memory_space<vmem>>, %arg8: memref<2x128xf32, #tpu.memory_space<vmem>>, %arg9: memref<2x128xf32, #tpu.memory_space<vmem>>, %arg10: memref<128x128xbf16, #tpu.memory_space<vmem>>, %arg11: memref<1x128xf32, #tpu.memory_space<vmem>>, %arg12: memref<8x128xf32, #tpu.memory_space<vmem>>) attributes {dimension_semantics = [#tpu.dimension_semantics<parallel>], iteration_bounds = array<i64: 1>, scalar_prefetch = 0 : i64, scratch_operands = 0 : i64, tpu.core_type = #tpu.core_type<tc>, window_params = [{transform_indices = @transform_0, window_bounds = array<i64: 8, 32>}, {pipeline_mode = #tpu.pipeline_mode<synchronous>, transform_indices = @transform_1, window_bounds = array<i64: 32, 128>}, {pipeline_mode = #tpu.pipeline_mode<synchronous>, transform_indices = @transform_2, window_bounds = array<i64: 1, 128>}, {pipeline_mode = #tpu.pipeline_mode<synchronous>, transform_indices = @transform_3, window_bounds = array<i64: 2, 128, 256>}, {pipeline_mode = #tpu.pipeline_mode<synchronous>, transform_indices = @transform_4, window_bounds = array<i64: 2, 256>}, {pipeline_mode = #tpu.pipeline_mode<synchronous>, transform_indices = @transform_5, window_bounds = array<i64: 2, 128, 128>}, {pipeline_mode = #tpu.pipeline_mode<synchronous>, transform_indices = @transform_6, window_bounds = array<i64: 2, 128>}, {pipeline_mode = #tpu.pipeline_mode<synchronous>, transform_indices = @transform_7, window_bounds = array<i64: 2, 128>}, {pipeline_mode = #tpu.pipeline_mode<synchronous>, transform_indices = @transform_8, window_bounds = array<i64: 2, 128>}, {pipeline_mode = #tpu.pipeline_mode<synchronous>, transform_indices = @transform_9, window_bounds = array<i64: 128, 128>}, {pipeline_mode = #tpu.pipeline_mode<synchronous>, transform_indices = @transform_10, window_bounds = array<i64: 1, 128>}, {transform_indices = @transform_11, window_bounds = array<i64: 8, 128>}]} {
    %0 = tpu.iota {dimensions = array<i32: 1>} : vector<1x128xi32>
    %c32_i32 = arith.constant 32 : i32
    %1 = vector.broadcast %c32_i32 : i32 to vector<1x128xi32>
    %2 = arith.cmpi slt, %0, %1 : vector<1x128xi32>
    %c0 = arith.constant 0 : index
    %c0_0 = arith.constant 0 : index
    %3 = vector.load %arg1[%c0, %c0_0] : memref<8x32xbf16, #tpu.memory_space<vmem>>, vector<8x32xbf16>
    %c0_1 = arith.constant 0 : index
    %c0_2 = arith.constant 0 : index
    %4 = vector.load %arg2[%c0_1, %c0_2] : memref<32x128xbf16, #tpu.memory_space<vmem>>, vector<32x128xbf16>
    %cst = arith.constant dense<0.000000e+00> : vector<8x128xf32>
    %5 = tpu.matmul %3, %4, %cst {dimension_numbers = #tpu.dot_dimension_numbers<[1], [0], [0], [1], [0, 0, 1, 1], [], []>} : vector<8x32xbf16>, vector<32x128xbf16>, vector<8x128xf32> -> vector<8x128xf32>
    %c0_3 = arith.constant 0 : index
    %c0_4 = arith.constant 0 : index
    %6 = vector.load %arg3[%c0_3, %c0_4] : memref<1x128xf32, #tpu.memory_space<vmem>>, vector<1x128xf32>
    %7 = vector.broadcast %6 : vector<1x128xf32> to vector<8x128xf32>
    %8 = arith.addf %5, %7 : vector<8x128xf32>
    %9 = arith.truncf %8 : vector<8x128xf32> to vector<8x128xbf16>
    %c0_5 = arith.constant 0 : index
    %c0_6 = arith.constant 0 : index
    %c0_7 = arith.constant 0 : index
    %10 = vector.load %arg4[%c0_5, %c0_6, %c0_7] : memref<2x128x256xbf16, #tpu.memory_space<vmem>>, vector<1x128x256xbf16>
    %11 = vector.shape_cast %10 : vector<1x128x256xbf16> to vector<128x256xbf16>
    %cst_8 = arith.constant dense<0.000000e+00> : vector<8x256xf32>
    %12 = tpu.matmul %9, %11, %cst_8 {dimension_numbers = #tpu.dot_dimension_numbers<[1], [0], [0], [1], [0, 0, 1, 1], [], []>} : vector<8x128xbf16>, vector<128x256xbf16>, vector<8x256xf32> -> vector<8x256xf32>
    %c0_9 = arith.constant 0 : index
    %c0_10 = arith.constant 0 : index
    %13 = vector.load %arg5[%c0_9, %c0_10] : memref<2x256xf32, #tpu.memory_space<vmem>>, vector<1x256xf32>
    %14 = vector.broadcast %13 : vector<1x256xf32> to vector<8x256xf32>
    %15 = arith.addf %12, %14 : vector<8x256xf32>
    %16 = vector.extract_strided_slice %15 {offsets = [0, 0], sizes = [8, 128], strides = [1, 1]} : vector<8x256xf32> to vector<8x128xf32>
    %cst_11 = arith.constant 0.000000e+00 : f32
    %17 = vector.broadcast %cst_11 : f32 to vector<8x128xf32>
    %18 = arith.maximumf %16, %17 : vector<8x128xf32>
    %19 = vector.extract_strided_slice %15 {offsets = [0, 128], sizes = [8, 128], strides = [1, 1]} : vector<8x256xf32> to vector<8x128xf32>
    %20 = arith.truncf %18 : vector<8x128xf32> to vector<8x128xbf16>
    %c0_12 = arith.constant 0 : index
    %c0_13 = arith.constant 0 : index
    %c0_14 = arith.constant 0 : index
    %21 = vector.load %arg6[%c0_12, %c0_13, %c0_14] : memref<2x128x128xbf16, #tpu.memory_space<vmem>>, vector<1x128x128xbf16>
    %22 = vector.shape_cast %21 : vector<1x128x128xbf16> to vector<128x128xbf16>
    %cst_15 = arith.constant dense<0.000000e+00> : vector<8x128xf32>
    %23 = tpu.matmul %20, %22, %cst_15 {dimension_numbers = #tpu.dot_dimension_numbers<[1], [0], [0], [1], [0, 0, 1, 1], [], []>} : vector<8x128xbf16>, vector<128x128xbf16>, vector<8x128xf32> -> vector<8x128xf32>
    %c0_16 = arith.constant 0 : index
    %c0_17 = arith.constant 0 : index
    %24 = vector.load %arg7[%c0_16, %c0_17] : memref<2x128xf32, #tpu.memory_space<vmem>>, vector<1x128xf32>
    %25 = vector.broadcast %24 : vector<1x128xf32> to vector<8x128xf32>
    %26 = arith.addf %23, %25 : vector<8x128xf32>
    %27 = arith.addf %26, %19 : vector<8x128xf32>
    %c0_18 = arith.constant 0 : index
    %c0_19 = arith.constant 0 : index
    %28 = vector.load %arg8[%c0_18, %c0_19] : memref<2x128xf32, #tpu.memory_space<vmem>>, vector<1x128xf32>
    %c0_20 = arith.constant 0 : index
    %c0_21 = arith.constant 0 : index
    %29 = vector.load %arg9[%c0_20, %c0_21] : memref<2x128xf32, #tpu.memory_space<vmem>>, vector<1x128xf32>
    %cst_22 = arith.constant dense<0.000000e+00> : vector<8xf32>
    %30 = vector.multi_reduction <add>, %27, %cst_22 [1] : vector<8x128xf32> to vector<8xf32>
    %31 = vector.shape_cast %30 : vector<8xf32> to vector<8x1xf32>
    %cst_23 = arith.constant 3.125000e-02 : f32
    %32 = vector.broadcast %cst_23 : f32 to vector<8x1xf32>
    %33 = arith.mulf %31, %32 : vector<8x1xf32>
    %34 = vector.broadcast %33 : vector<8x1xf32> to vector<8x128xf32>
    %35 = arith.subf %27, %34 : vector<8x128xf32>
    %cst_24 = arith.constant 0.000000e+00 : f32
    %36 = vector.shape_cast %2 : vector<1x128xi1> to vector<1x128xi1>
    %37 = vector.broadcast %36 : vector<1x128xi1> to vector<8x128xi1>
    %38 = vector.broadcast %cst_24 : f32 to vector<8x128xf32>
    %39 = arith.select %37, %35, %38 : vector<8x128xi1>, vector<8x128xf32>
    %40 = arith.mulf %39, %39 : vector<8x128xf32>
    %cst_25 = arith.constant dense<0.000000e+00> : vector<8xf32>
    %41 = vector.multi_reduction <add>, %40, %cst_25 [1] : vector<8x128xf32> to vector<8xf32>
    %42 = vector.shape_cast %41 : vector<8xf32> to vector<8x1xf32>
    %cst_26 = arith.constant 3.125000e-02 : f32
    %43 = vector.broadcast %cst_26 : f32 to vector<8x1xf32>
    %44 = arith.mulf %42, %43 : vector<8x1xf32>
    %cst_27 = arith.constant 9.99999974E-6 : f32
    %45 = vector.broadcast %cst_27 : f32 to vector<8x1xf32>
    %46 = arith.addf %44, %45 : vector<8x1xf32>
    %47 = math.rsqrt %46 : vector<8x1xf32>
    %48 = vector.broadcast %47 : vector<8x1xf32> to vector<8x128xf32>
    %49 = arith.mulf %39, %48 : vector<8x128xf32>
    %50 = vector.broadcast %28 : vector<1x128xf32> to vector<8x128xf32>
    %51 = arith.mulf %49, %50 : vector<8x128xf32>
    %52 = vector.broadcast %29 : vector<1x128xf32> to vector<8x128xf32>
    %53 = arith.addf %51, %52 : vector<8x128xf32>
    %54 = arith.truncf %53 : vector<8x128xf32> to vector<8x128xbf16>
    %c1 = arith.constant 1 : index
    %c0_28 = arith.constant 0 : index
    %c0_29 = arith.constant 0 : index
    %55 = vector.load %arg4[%c1, %c0_28, %c0_29] : memref<2x128x256xbf16, #tpu.memory_space<vmem>>, vector<1x128x256xbf16>
    %56 = vector.shape_cast %55 : vector<1x128x256xbf16> to vector<128x256xbf16>
    %cst_30 = arith.constant dense<0.000000e+00> : vector<8x256xf32>
    %57 = tpu.matmul %54, %56, %cst_30 {dimension_numbers = #tpu.dot_dimension_numbers<[1], [0], [0], [1], [0, 0, 1, 1], [], []>} : vector<8x128xbf16>, vector<128x256xbf16>, vector<8x256xf32> -> vector<8x256xf32>
    %c1_31 = arith.constant 1 : index
    %c0_32 = arith.constant 0 : index
    %58 = vector.load %arg5[%c1_31, %c0_32] : memref<2x256xf32, #tpu.memory_space<vmem>>, vector<1x256xf32>
    %59 = vector.broadcast %58 : vector<1x256xf32> to vector<8x256xf32>
    %60 = arith.addf %57, %59 : vector<8x256xf32>
    %61 = vector.extract_strided_slice %60 {offsets = [0, 0], sizes = [8, 128], strides = [1, 1]} : vector<8x256xf32> to vector<8x128xf32>
    %cst_33 = arith.constant 0.000000e+00 : f32
    %62 = vector.broadcast %cst_33 : f32 to vector<8x128xf32>
    %63 = arith.maximumf %61, %62 : vector<8x128xf32>
    %64 = vector.extract_strided_slice %60 {offsets = [0, 128], sizes = [8, 128], strides = [1, 1]} : vector<8x256xf32> to vector<8x128xf32>
    %65 = arith.truncf %63 : vector<8x128xf32> to vector<8x128xbf16>
    %c1_34 = arith.constant 1 : index
    %c0_35 = arith.constant 0 : index
    %c0_36 = arith.constant 0 : index
    %66 = vector.load %arg6[%c1_34, %c0_35, %c0_36] : memref<2x128x128xbf16, #tpu.memory_space<vmem>>, vector<1x128x128xbf16>
    %67 = vector.shape_cast %66 : vector<1x128x128xbf16> to vector<128x128xbf16>
    %cst_37 = arith.constant dense<0.000000e+00> : vector<8x128xf32>
    %68 = tpu.matmul %65, %67, %cst_37 {dimension_numbers = #tpu.dot_dimension_numbers<[1], [0], [0], [1], [0, 0, 1, 1], [], []>} : vector<8x128xbf16>, vector<128x128xbf16>, vector<8x128xf32> -> vector<8x128xf32>
    %c1_38 = arith.constant 1 : index
    %c0_39 = arith.constant 0 : index
    %69 = vector.load %arg7[%c1_38, %c0_39] : memref<2x128xf32, #tpu.memory_space<vmem>>, vector<1x128xf32>
    %70 = vector.broadcast %69 : vector<1x128xf32> to vector<8x128xf32>
    %71 = arith.addf %68, %70 : vector<8x128xf32>
    %72 = arith.addf %71, %64 : vector<8x128xf32>
    %c1_40 = arith.constant 1 : index
    %c0_41 = arith.constant 0 : index
    %73 = vector.load %arg8[%c1_40, %c0_41] : memref<2x128xf32, #tpu.memory_space<vmem>>, vector<1x128xf32>
    %c1_42 = arith.constant 1 : index
    %c0_43 = arith.constant 0 : index
    %74 = vector.load %arg9[%c1_42, %c0_43] : memref<2x128xf32, #tpu.memory_space<vmem>>, vector<1x128xf32>
    %cst_44 = arith.constant dense<0.000000e+00> : vector<8xf32>
    %75 = vector.multi_reduction <add>, %72, %cst_44 [1] : vector<8x128xf32> to vector<8xf32>
    %76 = vector.shape_cast %75 : vector<8xf32> to vector<8x1xf32>
    %cst_45 = arith.constant 3.125000e-02 : f32
    %77 = vector.broadcast %cst_45 : f32 to vector<8x1xf32>
    %78 = arith.mulf %76, %77 : vector<8x1xf32>
    %79 = vector.broadcast %78 : vector<8x1xf32> to vector<8x128xf32>
    %80 = arith.subf %72, %79 : vector<8x128xf32>
    %cst_46 = arith.constant 0.000000e+00 : f32
    %81 = vector.shape_cast %2 : vector<1x128xi1> to vector<1x128xi1>
    %82 = vector.broadcast %81 : vector<1x128xi1> to vector<8x128xi1>
    %83 = vector.broadcast %cst_46 : f32 to vector<8x128xf32>
    %84 = arith.select %82, %80, %83 : vector<8x128xi1>, vector<8x128xf32>
    %85 = arith.mulf %84, %84 : vector<8x128xf32>
    %cst_47 = arith.constant dense<0.000000e+00> : vector<8xf32>
    %86 = vector.multi_reduction <add>, %85, %cst_47 [1] : vector<8x128xf32> to vector<8xf32>
    %87 = vector.shape_cast %86 : vector<8xf32> to vector<8x1xf32>
    %cst_48 = arith.constant 3.125000e-02 : f32
    %88 = vector.broadcast %cst_48 : f32 to vector<8x1xf32>
    %89 = arith.mulf %87, %88 : vector<8x1xf32>
    %cst_49 = arith.constant 9.99999974E-6 : f32
    %90 = vector.broadcast %cst_49 : f32 to vector<8x1xf32>
    %91 = arith.addf %89, %90 : vector<8x1xf32>
    %92 = math.rsqrt %91 : vector<8x1xf32>
    %93 = vector.broadcast %92 : vector<8x1xf32> to vector<8x128xf32>
    %94 = arith.mulf %84, %93 : vector<8x128xf32>
    %95 = vector.broadcast %73 : vector<1x128xf32> to vector<8x128xf32>
    %96 = arith.mulf %94, %95 : vector<8x128xf32>
    %97 = vector.broadcast %74 : vector<1x128xf32> to vector<8x128xf32>
    %98 = arith.addf %96, %97 : vector<8x128xf32>
    %99 = arith.truncf %98 : vector<8x128xf32> to vector<8x128xbf16>
    %c0_50 = arith.constant 0 : index
    %c0_51 = arith.constant 0 : index
    %100 = vector.load %arg10[%c0_50, %c0_51] : memref<128x128xbf16, #tpu.memory_space<vmem>>, vector<128x128xbf16>
    %cst_52 = arith.constant dense<0.000000e+00> : vector<8x128xf32>
    %101 = tpu.matmul %99, %100, %cst_52 {dimension_numbers = #tpu.dot_dimension_numbers<[1], [0], [0], [1], [0, 0, 1, 1], [], []>} : vector<8x128xbf16>, vector<128x128xbf16>, vector<8x128xf32> -> vector<8x128xf32>
    %c0_53 = arith.constant 0 : index
    %c0_54 = arith.constant 0 : index
    %102 = vector.load %arg11[%c0_53, %c0_54] : memref<1x128xf32, #tpu.memory_space<vmem>>, vector<1x128xf32>
    %103 = vector.broadcast %102 : vector<1x128xf32> to vector<8x128xf32>
    %104 = arith.addf %101, %103 : vector<8x128xf32>
    %c0_55 = arith.constant 0 : index
    %c0_56 = arith.constant 0 : index
    %105 = vector.load %arg12[%c0_55, %c0_56] : memref<8x128xf32, #tpu.memory_space<vmem>>, vector<8x128xf32>
    tpu.vector_store %arg12[%c0_55, %c0_56], %104 {strides = array<i32>} : memref<8x128xf32, #tpu.memory_space<vmem>>, vector<8x128xf32>,
    return
  }
  func.func @transform_0(%arg0: i32) -> (i32, i32) {
    %c0_i32 = arith.constant 0 : i32
    %c0_i32_0 = arith.constant 0 : i32
    return %arg0, %c0_i32 : i32, i32
  }
  func.func @transform_1(%arg0: i32) -> (i32, i32) {
    %c0_i32 = arith.constant 0 : i32
    %c0_i32_0 = arith.constant 0 : i32
    %c0_i32_1 = arith.constant 0 : i32
    return %c0_i32, %c0_i32_0 : i32, i32
  }
  func.func @transform_2(%arg0: i32) -> (i32, i32) {
    %c0_i32 = arith.constant 0 : i32
    %c0_i32_0 = arith.constant 0 : i32
    %c0_i32_1 = arith.constant 0 : i32
    return %c0_i32, %c0_i32_0 : i32, i32
  }
  func.func @transform_3(%arg0: i32) -> (i32, i32, i32) {
    %c0_i32 = arith.constant 0 : i32
    %c0_i32_0 = arith.constant 0 : i32
    %c0_i32_1 = arith.constant 0 : i32
    %c0_i32_2 = arith.constant 0 : i32
    return %c0_i32, %c0_i32_0, %c0_i32_1 : i32, i32, i32
  }
  func.func @transform_4(%arg0: i32) -> (i32, i32) {
    %c0_i32 = arith.constant 0 : i32
    %c0_i32_0 = arith.constant 0 : i32
    %c0_i32_1 = arith.constant 0 : i32
    return %c0_i32, %c0_i32_0 : i32, i32
  }
  func.func @transform_5(%arg0: i32) -> (i32, i32, i32) {
    %c0_i32 = arith.constant 0 : i32
    %c0_i32_0 = arith.constant 0 : i32
    %c0_i32_1 = arith.constant 0 : i32
    %c0_i32_2 = arith.constant 0 : i32
    return %c0_i32, %c0_i32_0, %c0_i32_1 : i32, i32, i32
  }
  func.func @transform_6(%arg0: i32) -> (i32, i32) {
    %c0_i32 = arith.constant 0 : i32
    %c0_i32_0 = arith.constant 0 : i32
    %c0_i32_1 = arith.constant 0 : i32
    return %c0_i32, %c0_i32_0 : i32, i32
  }
  func.func @transform_7(%arg0: i32) -> (i32, i32) {
    %c0_i32 = arith.constant 0 : i32
    %c0_i32_0 = arith.constant 0 : i32
    %c0_i32_1 = arith.constant 0 : i32
    return %c0_i32, %c0_i32_0 : i32, i32
  }
  func.func @transform_8(%arg0: i32) -> (i32, i32) {
    %c0_i32 = arith.constant 0 : i32
    %c0_i32_0 = arith.constant 0 : i32
    %c0_i32_1 = arith.constant 0 : i32
    return %c0_i32, %c0_i32_0 : i32, i32
  }
  func.func @transform_9(%arg0: i32) -> (i32, i32) {
    %c0_i32 = arith.constant 0 : i32
    %c0_i32_0 = arith.constant 0 : i32
    %c0_i32_1 = arith.constant 0 : i32
    return %c0_i32, %c0_i32_0 : i32, i32
  }
  func.func @transform_10(%arg0: i32) -> (i32, i32) {
    %c0_i32 = arith.constant 0 : i32
    %c0_i32_0 = arith.constant 0 : i32
    %c0_i32_1 = arith.constant 0 : i32
    return %c0_i32, %c0_i32_0 : i32, i32
  }
  func.func @transform_11(%arg0: i32) -> (i32, i32) {
    %c0_i32 = arith.constant 0 : i32
    %c0_i32_0 = arith.constant 0 : i32
    return %arg0, %c0_i32 : i32, i32
  }
}

</mosaic_0001>

<llo_original>
// kernel: tpu_custom_call.1
$region0: #{tpu_custom_call.1}
  #allocation0 [shape = 'u32[]', space=smem, size = 0x4, offset = 0x4, fixed_abs, tag = 'smem constant byte address 0x4 - core index']
  #allocation1 [shape = 'u32[72,128]{1,0:T(1,128)}', space=vmem, size = 0x9000, scoped, tag = 'internal scratch']
  %s0 = inlined_call_operand.hbm [shape: bf16[2,32], index: 0, kind: input, shape index: {}]
  %s1 = inlined_call_operand.hbm [shape: bf16[32,128], index: 1, kind: input, shape index: {}]
  %s2 = inlined_call_operand.hbm [shape: f32[1,128], index: 2, kind: input, shape index: {}]
  %s3 = inlined_call_operand.hbm [shape: bf16[2,128,256], index: 3, kind: input, shape index: {}]
  %s4 = inlined_call_operand.hbm [shape: f32[2,256], index: 4, kind: input, shape index: {}]
  %s5 = inlined_call_operand.hbm [shape: bf16[2,128,128], index: 5, kind: input, shape index: {}]
  %s6 = inlined_call_operand.vmem [shape: f32[2,128], index: 6, kind: input, shape index: {}]
  %s7 = inlined_call_operand.vmem [shape: f32[2,128], index: 7, kind: input, shape index: {}]
  %s8 = inlined_call_operand.vmem [shape: f32[2,128], index: 8, kind: input, shape index: {}]
  %s9 = inlined_call_operand.hbm [shape: bf16[128,128], index: 9, kind: input, shape index: {}]
  %s10 = inlined_call_operand.vmem [shape: f32[1,128], index: 10, kind: input, shape index: {}]
  %s11 = inlined_call_operand.hbm [shape: f32[2,128], index: 11, kind: output, shape index: {}]
  %s12 = sld [smem:[#allocation0]]
  $region82: #{tpu_custom_call.1} parent=0
    _
  %s14 = ssub.s32 1, %s12
  %s15 = scalar_select 0, %s14, %s12
  $region1: #{tpu_custom_call.1} parent=0
    #allocation2 [shape = 'u8[2048]{0}', space=vmem, size = 0x800, scoped, tag = 'input window, operand 0, single buffered']
    #allocation3 [shape = 's32[1]{0}', space=sflag, size = 0x4, scoped, tag = 'scoped memory for tpu_custom_call.1']
    #allocation4 [shape = 's32[1]{0}', space=sflag, size = 0x4, scoped, tag = 'scoped memory for tpu_custom_call.1']
    #allocation5 [shape = 'u8[8192]{0}', space=vmem, size = 0x2000, scoped, tag = 'input window, operand 1, single buffered']
    #allocation6 [shape = 's32[1]{0}', space=sflag, size = 0x4, scoped, tag = 'scoped memory for tpu_custom_call.1']
    #allocation7 [shape = 'u8[512]{0}', space=vmem, size = 0x400, scoped, tag = 'input window, operand 2, single buffered']
    #allocation8 [shape = 'u8[131072]{0}', space=vmem, size = 0x20000, scoped, tag = 'input window, operand 3, single buffered']
    #allocation9 [shape = 's32[1]{0}', space=sflag, size = 0x4, scoped, tag = 'scoped memory for tpu_custom_call.1']
    #allocation10 [shape = 'u8[2048]{0}', space=vmem, size = 0x800, scoped, tag = 'input window, operand 4, single buffered']
    #allocation11 [shape = 'u8[65536]{0}', space=vmem, size = 0x10000, scoped, tag = 'input window, operand 5, single buffered']
    #allocation12 [shape = 's32[1]{0}', space=sflag, size = 0x4, scoped, tag = 'scoped memory for tpu_custom_call.1']
    #allocation13 [shape = 'u8[32768]{0}', space=vmem, size = 0x8000, scoped, tag = 'input window, operand 9, single buffered']
    #allocation14 [shape = 'u8[4096]{0}', space=vmem, size = 0x1000, scoped, tag = 'output window, operand 0, single buffered']
    %16 = vsyncpa [#allocation3], 0
    %17 = vsyncpa [#allocation6], 0
    %18 = vsyncpa [#allocation9], 0
    %19 = vsyncpa [#allocation12], 0
    %20 = vsyncpa [#allocation4], 0
    // Predicated region
    $region2: #{tpu_custom_call.1} parent=1 // pred_check
      _
    $region3: #{tpu_custom_call.1} parent=1 // pred_check_branch
      %22 = sbr.rel (0) target = $region5
    $region4: #{tpu_custom_call.1} parent=1 // pred_region
      %24 = vsyncadd [#allocation3], 48
      %s25 = sshll.u32 %s0, 4
      %s26 = int_to_ptr.hbm [resolvable:$true] %s25
      %s27 = sshll.u32 [#allocation2], 4
      %s28 = int_to_ptr.vmem [resolvable:$true] %s27
      %33 = dma.hbm_to_vmem [thread:$0]  %s26, 16, %s28, [#allocation3], 16, 16, 1
    $region5: #{tpu_custom_call.1} parent=1 // pred_fallthru
      _
    // Predicated region
    $region6: #{tpu_custom_call.1} parent=1 // pred_check
      _
    $region7: #{tpu_custom_call.1} parent=1 // pred_check_branch
      %35 = sbr.rel (0) target = $region9
    $region8: #{tpu_custom_call.1} parent=1 // pred_region
      %37 = vsyncadd [#allocation6], 0
      %s38 = sshll.u32 %s1, 4
      %s39 = int_to_ptr.hbm [resolvable:$true] %s38
      %s40 = sshll.u32 [#allocation5], 4
      %s41 = int_to_ptr.vmem [resolvable:$true] %s40
      %46 = dma.hbm_to_vmem [thread:$0]  %s39, 256, %s41, [#allocation6], 64, 64, 4
    $region9: #{tpu_custom_call.1} parent=1 // pred_fallthru
      _
    // Predicated region
    $region10: #{tpu_custom_call.1} parent=1 // pred_check
      _
    $region11: #{tpu_custom_call.1} parent=1 // pred_check_branch
      %48 = sbr.rel (0) target = $region13
    $region12: #{tpu_custom_call.1} parent=1 // pred_region
      %50 = vsyncadd [#allocation6], 0
      %s52 = sshll.u32 %s2, 4
      %s53 = int_to_ptr.hbm [resolvable:$true] %s52
      %s54 = sshll.u32 [#allocation7], 4
      %s55 = int_to_ptr.vmem [resolvable:$true] %s54
      %57 = dma.hbm_to_vmem [thread:$0]  %s53, 16, %s55, [#allocation6]
    $region13: #{tpu_custom_call.1} parent=1 // pred_fallthru
      _
    // Predicated region
    $region14: #{tpu_custom_call.1} parent=1 // pred_check
      _
    $region15: #{tpu_custom_call.1} parent=1 // pred_check_branch
      %59 = sbr.rel (0) target = $region17
    $region16: #{tpu_custom_call.1} parent=1 // pred_region
      %61 = vsyncadd [#allocation9], 0
      %s62 = sshll.u32 %s3, 4
      %s63 = int_to_ptr.hbm [resolvable:$true] %s62
      %s64 = sshll.u32 [#allocation8], 4
      %s65 = int_to_ptr.vmem [resolvable:$true] %s64
      %70 = dma.hbm_to_vmem [thread:$0]  %s63, 4096, %s65, [#allocation9], 128, 128, 8
    $region17: #{tpu_custom_call.1} parent=1 // pred_fallthru
      _
    // Predicated region
    $region18: #{tpu_custom_call.1} parent=1 // pred_check
      _
    $region19: #{tpu_custom_call.1} parent=1 // pred_check_branch
      %72 = sbr.rel (0) target = $region21
    $region20: #{tpu_custom_call.1} parent=1 // pred_region
      %74 = vsyncadd [#allocation9], 0
      %s76 = sshll.u32 %s4, 4
      %s77 = int_to_ptr.hbm [resolvable:$true] %s76
      %s78 = sshll.u32 [#allocation10], 4
      %s79 = int_to_ptr.vmem [resolvable:$true] %s78
      %81 = dma.hbm_to_vmem [thread:$0]  %s77, 64, %s79, [#allocation9]
    $region21: #{tpu_custom_call.1} parent=1 // pred_fallthru
      _
    // Predicated region
    $region22: #{tpu_custom_call.1} parent=1 // pred_check
      _
    $region23: #{tpu_custom_call.1} parent=1 // pred_check_branch
      %83 = sbr.rel (0) target = $region25
    $region24: #{tpu_custom_call.1} parent=1 // pred_region
      %85 = vsyncadd [#allocation12], 0
      %s86 = sshll.u32 %s5, 4
      %s87 = int_to_ptr.hbm [resolvable:$true] %s86
      %s88 = sshll.u32 [#allocation11], 4
      %s89 = int_to_ptr.vmem [resolvable:$true] %s88
      %94 = dma.hbm_to_vmem [thread:$0]  %s87, 2048, %s89, [#allocation12], 64, 64, 4
    $region25: #{tpu_custom_call.1} parent=1 // pred_fallthru
      _
    // Predicated region
    $region26: #{tpu_custom_call.1} parent=1 // pred_check
      _
    $region27: #{tpu_custom_call.1} parent=1 // pred_check_branch
      %96 = sbr.rel (0) target = $region29
    $region28: #{tpu_custom_call.1} parent=1 // pred_region
      _
    $region29: #{tpu_custom_call.1} parent=1 // pred_fallthru
      _
    // Predicated region
    $region30: #{tpu_custom_call.1} parent=1 // pred_check
      _
    $region31: #{tpu_custom_call.1} parent=1 // pred_check_branch
      %98 = sbr.rel (0) target = $region33
    $region32: #{tpu_custom_call.1} parent=1 // pred_region
      _
    $region33: #{tpu_custom_call.1} parent=1 // pred_fallthru
      _
    // Predicated region
    $region34: #{tpu_custom_call.1} parent=1 // pred_check
      _
    $region35: #{tpu_custom_call.1} parent=1 // pred_check_branch
      %100 = sbr.rel (0) target = $region37
    $region36: #{tpu_custom_call.1} parent=1 // pred_region
      _
    $region37: #{tpu_custom_call.1} parent=1 // pred_fallthru
      _
    // Predicated region
    $region38: #{tpu_custom_call.1} parent=1 // pred_check
      _
    $region39: #{tpu_custom_call.1} parent=1 // pred_check_branch
      %102 = sbr.rel (0) target = $region41
    $region40: #{tpu_custom_call.1} parent=1 // pred_region
      %104 = vsyncadd [#allocation12], 0
      %s105 = sshll.u32 %s9, 4
      %s106 = int_to_ptr.hbm [resolvable:$true] %s105
      %s107 = sshll.u32 [#allocation13], 4
      %s108 = int_to_ptr.vmem [resolvable:$true] %s107
      %113 = dma.hbm_to_vmem [thread:$0]  %s106, 1024, %s108, [#allocation12], 64, 64, 4
    $region41: #{tpu_custom_call.1} parent=1 // pred_fallthru
      _
    // Predicated region
    $region42: #{tpu_custom_call.1} parent=1 // pred_check
      _
    $region43: #{tpu_custom_call.1} parent=1 // pred_check_branch
      %115 = sbr.rel (0) target = $region45
    $region44: #{tpu_custom_call.1} parent=1 // pred_region
      _
    $region45: #{tpu_custom_call.1} parent=1 // pred_fallthru
      _
    // Predicated region
    $region46: #{tpu_custom_call.1} parent=1 // pred_check
      _
    $region47: #{tpu_custom_call.1} parent=1 // pred_check_branch
      %117 = sbr.rel (0) target = $region49
    $region48: #{tpu_custom_call.1} parent=1 // pred_region
      %119 = dma.done [#allocation3], 64
    $region49: #{tpu_custom_call.1} parent=1 // pred_fallthru
      _
    // Predicated region
    $region50: #{tpu_custom_call.1} parent=1 // pred_check
      _
    $region51: #{tpu_custom_call.1} parent=1 // pred_check_branch
      %121 = sbr.rel (0) target = $region53
    $region52: #{tpu_custom_call.1} parent=1 // pred_region
      %123 = dma.done [#allocation6], 256
    $region53: #{tpu_custom_call.1} parent=1 // pred_fallthru
      _
    // Predicated region
    $region54: #{tpu_custom_call.1} parent=1 // pred_check
      _
    $region55: #{tpu_custom_call.1} parent=1 // pred_check_branch
      %125 = sbr.rel (0) target = $region57
    $region56: #{tpu_custom_call.1} parent=1 // pred_region
      %127 = dma.done [#allocation6], 16
    $region57: #{tpu_custom_call.1} parent=1 // pred_fallthru
      _
    // Predicated region
    $region58: #{tpu_custom_call.1} parent=1 // pred_check
      _
    $region59: #{tpu_custom_call.1} parent=1 // pred_check_branch
      %129 = sbr.rel (0) target = $region61
    $region60: #{tpu_custom_call.1} parent=1 // pred_region
      %131 = dma.done [#allocation9], 4096
    $region61: #{tpu_custom_call.1} parent=1 // pred_fallthru
      _
    // Predicated region
    $region62: #{tpu_custom_call.1} parent=1 // pred_check
      _
    $region63: #{tpu_custom_call.1} parent=1 // pred_check_branch
      %133 = sbr.rel (0) target = $region65
    $region64: #{tpu_custom_call.1} parent=1 // pred_region
      %135 = dma.done [#allocation9], 64
    $region65: #{tpu_custom_call.1} parent=1 // pred_fallthru
      _
    // Predicated region
    $region66: #{tpu_custom_call.1} parent=1 // pred_check
      _
    $region67: #{tpu_custom_call.1} parent=1 // pred_check_branch
      %137 = sbr.rel (0) target = $region69
    $region68: #{tpu_custom_call.1} parent=1 // pred_region
      %139 = dma.done [#allocation12], 2048
    $region69: #{tpu_custom_call.1} parent=1 // pred_fallthru
      _
    // Predicated region
    $region70: #{tpu_custom_call.1} parent=1 // pred_check
      _
    $region71: #{tpu_custom_call.1} parent=1 // pred_check_branch
      %141 = sbr.rel (0) target = $region73
    $region72: #{tpu_custom_call.1} parent=1 // pred_region
      %143 = dma.done [#allocation12], 1024
    $region73: #{tpu_custom_call.1} parent=1 // pred_fallthru
      _
    %v145 = vlaneseq
    %v146 = vand.u32 %v145, 127
    %vm147 = vcmp.lt.s32.totalorder %v146, 32
    %v148 = vld [vmem:[#allocation2] sm:$0x1]
    %v149 = vld [vmem:[#allocation2 + $0x1] sm:$0x1]
    %v150 = vld [vmem:[#allocation2 + $0x2] sm:$0x1]
    %v151 = vld [vmem:[#allocation2 + $0x3] sm:$0x1]
    %v152 = vld [vmem:[#allocation5] sm:$0xf]
    %v153 = vld [vmem:[#allocation5 + $0x4] sm:$0xf]
    %v154 = vld [vmem:[#allocation5 + $0x8] sm:$0xf]
    %v155 = vld [vmem:[#allocation5 + $0xc] sm:$0xf]
    %v156 = vld [vmem:[#allocation7] sm:$0x1]
    %v158 = vperm.slane %v156, 0
    %161 = vst [vmem:[#allocation1] ss:$9 sm:$0xff] %v148
    %s163 = scalar_lea.vmem [#allocation1], 1
    %164 = vst [vmem:[%s163] ss:$9 sm:$0xff] %v149
    %s166 = scalar_lea.vmem [#allocation1], 2
    %167 = vst [vmem:[%s166] ss:$9 sm:$0xff] %v150
    %s169 = scalar_lea.vmem [#allocation1], 3
    %170 = vst [vmem:[%s169] ss:$9 sm:$0xff] %v151
    %v171 = vld [vmem:[#allocation1] sm:$0xff]
    %v176 = vunpack.c.l.b16 %v152
    %v177 = vunpack.c.l.b16 %v153
    %v178 = vunpack.c.l.b16 %v154
    %v179 = vunpack.c.l.b16 %v155
    %v180 = vpack.c.b16 %v177, %v176
    %v181 = vpack.c.b16 %v179, %v178
    %vm184 = vcmask 261120
    %v185 = vsel %vm184, %v171, 0
    %187 = vmatpush.bf16.msra.mxu0 0
    %188 = vmatpush.bf16.msra.mxu0 0
    %189 = vmatpush.bf16.msra.mxu0 0
    %190 = vmatpush.bf16.msra.mxu0 0
    %191 = vmatpush.bf16.msra.mxu0 0
    %192 = vmatpush.bf16.msra.mxu0 0
    %193 = vmatpush.bf16.msra.mxu0 %v181
    %194 = vmatpush.bf16.msra.mxu0 %v180
    %195 = vmatmul.bf16.gmra.mxu0 %v185
    %v196 = vpop.f32.mrf.mxu0
    %v197 = vadd.f32 %v158, %v196
    %v198 = vpop.f32.mrf.mxu0
    %199 = vdwg.mxu0
    %v200 = vpack.c.bf16 %v197, %v197
    %v201 = vld [vmem:[#allocation8] sm:$0xff]
    %v202 = vld [vmem:[#allocation8 + $0x8] sm:$0xff]
    %v203 = vld [vmem:[#allocation8 + $0x10] sm:$0xff]
    %v204 = vld [vmem:[#allocation8 + $0x18] sm:$0xff]
    %v205 = vld [vmem:[#allocation8 + $0x20] sm:$0xff]
    %v206 = vld [vmem:[#allocation8 + $0x28] sm:$0xff]
    %v207 = vld [vmem:[#allocation8 + $0x30] sm:$0xff]
    %v208 = vld [vmem:[#allocation8 + $0x38] sm:$0xff]
    %v209 = vld [vmem:[#allocation8 + $0x40] sm:$0xff]
    %v210 = vld [vmem:[#allocation8 + $0x48] sm:$0xff]
    %v211 = vld [vmem:[#allocation8 + $0x50] sm:$0xff]
    %v212 = vld [vmem:[#allocation8 + $0x58] sm:$0xff]
    %v213 = vld [vmem:[#allocation8 + $0x60] sm:$0xff]
    %v214 = vld [vmem:[#allocation8 + $0x68] sm:$0xff]
    %v215 = vld [vmem:[#allocation8 + $0x70] sm:$0xff]
    %v216 = vld [vmem:[#allocation8 + $0x78] sm:$0xff]
    %v217 = vld [vmem:[#allocation10] ss:$2 sm:$0x3]
    %v219 = vperm.slane %v217, 0
    %v220 = vperm.slane %v217, 1
    %v239 = vunpack.c.l.b16 %v201
    %v240 = vunpack.c.h.b16 %v201
    %v241 = vunpack.c.l.b16 %v202
    %v242 = vunpack.c.h.b16 %v202
    %v243 = vunpack.c.l.b16 %v203
    %v244 = vunpack.c.h.b16 %v203
    %v245 = vunpack.c.l.b16 %v204
    %v246 = vunpack.c.h.b16 %v204
    %v247 = vunpack.c.l.b16 %v205
    %v248 = vunpack.c.h.b16 %v205
    %v249 = vunpack.c.l.b16 %v206
    %v250 = vunpack.c.h.b16 %v206
    %v251 = vunpack.c.l.b16 %v207
    %v252 = vunpack.c.h.b16 %v207
    %v253 = vunpack.c.l.b16 %v208
    %v254 = vunpack.c.h.b16 %v208
    %v255 = vunpack.c.l.b16 %v209
    %v256 = vunpack.c.h.b16 %v209
    %v257 = vunpack.c.l.b16 %v210
    %v258 = vunpack.c.h.b16 %v210
    %v259 = vunpack.c.l.b16 %v211
    %v260 = vunpack.c.h.b16 %v211
    %v261 = vunpack.c.l.b16 %v212
    %v262 = vunpack.c.h.b16 %v212
    %v263 = vunpack.c.l.b16 %v213
    %v264 = vunpack.c.h.b16 %v213
    %v265 = vunpack.c.l.b16 %v214
    %v266 = vunpack.c.h.b16 %v214
    %v267 = vunpack.c.l.b16 %v215
    %v268 = vunpack.c.h.b16 %v215
    %v269 = vunpack.c.l.b16 %v216
    %v270 = vunpack.c.h.b16 %v216
    %v271 = vpack.c.b16 %v241, %v239
    %v272 = vpack.c.b16 %v242, %v240
    %v273 = vpack.c.b16 %v245, %v243
    %v274 = vpack.c.b16 %v246, %v244
    %v275 = vpack.c.b16 %v249, %v247
    %v276 = vpack.c.b16 %v250, %v248
    %v277 = vpack.c.b16 %v253, %v251
    %v278 = vpack.c.b16 %v254, %v252
    %v279 = vpack.c.b16 %v257, %v255
    %v280 = vpack.c.b16 %v258, %v256
    %v281 = vpack.c.b16 %v261, %v259
    %v282 = vpack.c.b16 %v262, %v260
    %v283 = vpack.c.b16 %v265, %v263
    %v284 = vpack.c.b16 %v266, %v264
    %v285 = vpack.c.b16 %v269, %v267
    %v286 = vpack.c.b16 %v270, %v268
    %303 = vmatpush.bf16.msra.mxu0 %v285
    %304 = vmatpush.bf16.msra.mxu0 %v283
    %305 = vmatpush.bf16.msra.mxu0 %v281
    %306 = vmatpush.bf16.msra.mxu0 %v279
    %307 = vmatpush.bf16.msra.mxu0 %v277
    %308 = vmatpush.bf16.msra.mxu0 %v275
    %309 = vmatpush.bf16.msra.mxu0 %v273
    %310 = vmatpush.bf16.msra.mxu0 %v271
    %311 = vmatmul.bf16.gmra.mxu0 %v200
    %v312 = vpop.f32.mrf.mxu0
    %v313 = vadd.f32 %v219, %v312
    %v314 = vpop.f32.mrf.mxu0
    %315 = vdwg.mxu0
    %316 = vmatpush.bf16.msra.mxu0 %v286
    %317 = vmatpush.bf16.msra.mxu0 %v284
    %318 = vmatpush.bf16.msra.mxu0 %v282
    %319 = vmatpush.bf16.msra.mxu0 %v280
    %320 = vmatpush.bf16.msra.mxu0 %v278
    %321 = vmatpush.bf16.msra.mxu0 %v276
    %322 = vmatpush.bf16.msra.mxu0 %v274
    %323 = vmatpush.bf16.msra.mxu0 %v272
    %324 = vmatmul.bf16.gmra.mxu0 %v200
    %v325 = vpop.f32.mrf.mxu0
    %v326 = vadd.f32 %v220, %v325
    %v327 = vpop.f32.mrf.mxu0
    %328 = vdwg.mxu0
    %v329 = vmax.f32 %v313, 0.0
    %v330 = vpack.c.bf16 %v329, %v329
    %v331 = vld [vmem:[#allocation11] sm:$0xf]
    %v332 = vld [vmem:[#allocation11 + $0x4] sm:$0xf]
    %v333 = vld [vmem:[#allocation11 + $0x8] sm:$0xf]
    %v334 = vld [vmem:[#allocation11 + $0xc] sm:$0xf]
    %v335 = vld [vmem:[#allocation11 + $0x10] sm:$0xf]
    %v336 = vld [vmem:[#allocation11 + $0x14] sm:$0xf]
    %v337 = vld [vmem:[#allocation11 + $0x18] sm:$0xf]
    %v338 = vld [vmem:[#allocation11 + $0x1c] sm:$0xf]
    %v339 = vld [vmem:[#allocation11 + $0x20] sm:$0xf]
    %v340 = vld [vmem:[#allocation11 + $0x24] sm:$0xf]
    %v341 = vld [vmem:[#allocation11 + $0x28] sm:$0xf]
    %v342 = vld [vmem:[#allocation11 + $0x2c] sm:$0xf]
    %v343 = vld [vmem:[#allocation11 + $0x30] sm:$0xf]
    %v344 = vld [vmem:[#allocation11 + $0x34] sm:$0xf]
    %v345 = vld [vmem:[#allocation11 + $0x38] sm:$0xf]
    %v346 = vld [vmem:[#allocation11 + $0x3c] sm:$0xf]
    %v347 = vld [vmem:[%s6] sm:$0x1]
    %v348 = vperm.slane %v347, 0
    %v365 = vunpack.c.l.b16 %v331
    %v366 = vunpack.c.l.b16 %v332
    %v367 = vunpack.c.l.b16 %v333
    %v368 = vunpack.c.l.b16 %v334
    %v369 = vunpack.c.l.b16 %v335
    %v370 = vunpack.c.l.b16 %v336
    %v371 = vunpack.c.l.b16 %v337
    %v372 = vunpack.c.l.b16 %v338
    %v373 = vunpack.c.l.b16 %v339
    %v374 = vunpack.c.l.b16 %v340
    %v375 = vunpack.c.l.b16 %v341
    %v376 = vunpack.c.l.b16 %v342
    %v377 = vunpack.c.l.b16 %v343
    %v378 = vunpack.c.l.b16 %v344
    %v379 = vunpack.c.l.b16 %v345
    %v380 = vunpack.c.l.b16 %v346
    %v381 = vpack.c.b16 %v366, %v365
    %v382 = vpack.c.b16 %v368, %v367
    %v383 = vpack.c.b16 %v370, %v369
    %v384 = vpack.c.b16 %v372, %v371
    %v385 = vpack.c.b16 %v374, %v373
    %v386 = vpack.c.b16 %v376, %v375
    %v387 = vpack.c.b16 %v378, %v377
    %v388 = vpack.c.b16 %v380, %v379
    %397 = vmatpush.bf16.msra.mxu0 %v388
    %398 = vmatpush.bf16.msra.mxu0 %v387
    %399 = vmatpush.bf16.msra.mxu0 %v386
    %400 = vmatpush.bf16.msra.mxu0 %v385
    %401 = vmatpush.bf16.msra.mxu0 %v384
    %402 = vmatpush.bf16.msra.mxu0 %v383
    %403 = vmatpush.bf16.msra.mxu0 %v382
    %404 = vmatpush.bf16.msra.mxu0 %v381
    %405 = vmatmul.bf16.gmra.mxu0 %v330
    %v406 = vpop.f32.mrf.mxu0
    %v407 = vadd.f32 %v348, %v406
    %v408 = vpop.f32.mrf.mxu0
    %409 = vdwg.mxu0
    %v410 = vadd.f32 %v407, %v326
    %v411 = vld [vmem:[%s7] sm:$0x1]
    %v412 = vld [vmem:[%s8] sm:$0x1]
    %413 = vadd.xlane.f32.xlu0 %v410
    %v414 = vpop.xlane.xlu0 %413
    %v415 = vmul.f32 %v414, 0.03125
    %v416 = vsub.f32 %v410, %v415
    %v417 = vsel %vm147, 1, 0
    %vm418 = vcmp.eq.s32.totalorder %v417, 1
    %v419 = vsel %vm418, %v416, 0.0
    %v420 = vmul.f32 %v419, %v419
    %421 = vadd.xlane.f32.xlu0 %v420
    %v422 = vpop.xlane.xlu0 %421
    %v423 = vmul.f32 %v422, 0.03125
    %v424 = vadd.f32 %v423, 1e-05
    %v425 = vrsqrt.pop %v424
    %v426 = vmul.f32 %v425, %v424
    %v427 = vmul.f32 %v426, %v425
    %v428 = vmul.f32 0.5, %v427
    %v429 = vsub.f32 1.5, %v428
    %v430 = vmul.f32 %v425, %v429
    %vm431 = vweird.f32 %v424
    %vm432 = vweird.f32 %v425
    %vm433 = vmor %vm431, %vm432
    %v434 = vsel %vm433, %v425, %v430
    %v435 = vmul.f32 %v419, %v434
    %v436 = vperm.slane %v411, 0
    %v437 = vmul.f32 %v435, %v436
    %v438 = vperm.slane %v412, 0
    %v439 = vadd.f32 %v437, %v438
    %v440 = vpack.c.bf16 %v439, %v439
    %s441 = scalar_lea.vmem [#allocation8], 128
    %v442 = vld [vmem:[%s441] sm:$0xff]
    %v443 = vld [vmem:[%s441 + $0x8] sm:$0xff]
    %v444 = vld [vmem:[%s441 + $0x10] sm:$0xff]
    %v445 = vld [vmem:[%s441 + $0x18] sm:$0xff]
    %v446 = vld [vmem:[%s441 + $0x20] sm:$0xff]
    %v447 = vld [vmem:[%s441 + $0x28] sm:$0xff]
    %v448 = vld [vmem:[%s441 + $0x30] sm:$0xff]
    %v449 = vld [vmem:[%s441 + $0x38] sm:$0xff]
    %v450 = vld [vmem:[%s441 + $0x40] sm:$0xff]
    %v451 = vld [vmem:[%s441 + $0x48] sm:$0xff]
    %v452 = vld [vmem:[%s441 + $0x50] sm:$0xff]
    %v453 = vld [vmem:[%s441 + $0x58] sm:$0xff]
    %v454 = vld [vmem:[%s441 + $0x60] sm:$0xff]
    %v455 = vld [vmem:[%s441 + $0x68] sm:$0xff]
    %v456 = vld [vmem:[%s441 + $0x70] sm:$0xff]
    %v457 = vld [vmem:[%s441 + $0x78] sm:$0xff]
    %s458 = scalar_lea.vmem [#allocation10], 1
    %v459 = vld [vmem:[%s458] ss:$2 sm:$0x3]
    %v461 = vperm.slane %v459, 0
    %v462 = vperm.slane %v459, 1
    %v481 = vunpack.c.l.b16 %v442
    %v482 = vunpack.c.h.b16 %v442
    %v483 = vunpack.c.l.b16 %v443
    %v484 = vunpack.c.h.b16 %v443
    %v485 = vunpack.c.l.b16 %v444
    %v486 = vunpack.c.h.b16 %v444
    %v487 = vunpack.c.l.b16 %v445
    %v488 = vunpack.c.h.b16 %v445
    %v489 = vunpack.c.l.b16 %v446
    %v490 = vunpack.c.h.b16 %v446
    %v491 = vunpack.c.l.b16 %v447
    %v492 = vunpack.c.h.b16 %v447
    %v493 = vunpack.c.l.b16 %v448
    %v494 = vunpack.c.h.b16 %v448
    %v495 = vunpack.c.l.b16 %v449
    %v496 = vunpack.c.h.b16 %v449
    %v497 = vunpack.c.l.b16 %v450
    %v498 = vunpack.c.h.b16 %v450
    %v499 = vunpack.c.l.b16 %v451
    %v500 = vunpack.c.h.b16 %v451
    %v501 = vunpack.c.l.b16 %v452
    %v502 = vunpack.c.h.b16 %v452
    %v503 = vunpack.c.l.b16 %v453
    %v504 = vunpack.c.h.b16 %v453
    %v505 = vunpack.c.l.b16 %v454
    %v506 = vunpack.c.h.b16 %v454
    %v507 = vunpack.c.l.b16 %v455
    %v508 = vunpack.c.h.b16 %v455
    %v509 = vunpack.c.l.b16 %v456
    %v510 = vunpack.c.h.b16 %v456
    %v511 = vunpack.c.l.b16 %v457
    %v512 = vunpack.c.h.b16 %v457
    %v513 = vpack.c.b16 %v483, %v481
    %v514 = vpack.c.b16 %v484, %v482
    %v515 = vpack.c.b16 %v487, %v485
    %v516 = vpack.c.b16 %v488, %v486
    %v517 = vpack.c.b16 %v491, %v489
    %v518 = vpack.c.b16 %v492, %v490
    %v519 = vpack.c.b16 %v495, %v493
    %v520 = vpack.c.b16 %v496, %v494
    %v521 = vpack.c.b16 %v499, %v497
    %v522 = vpack.c.b16 %v500, %v498
    %v523 = vpack.c.b16 %v503, %v501
    %v524 = vpack.c.b16 %v504, %v502
    %v525 = vpack.c.b16 %v507, %v505
    %v526 = vpack.c.b16 %v508, %v506
    %v527 = vpack.c.b16 %v511, %v509
    %v528 = vpack.c.b16 %v512, %v510
    %545 = vmatpush.bf16.msra.mxu0 %v527
    %546 = vmatpush.bf16.msra.mxu0 %v525
    %547 = vmatpush.bf16.msra.mxu0 %v523
    %548 = vmatpush.bf16.msra.mxu0 %v521
    %549 = vmatpush.bf16.msra.mxu0 %v519
    %550 = vmatpush.bf16.msra.mxu0 %v517
    %551 = vmatpush.bf16.msra.mxu0 %v515
    %552 = vmatpush.bf16.msra.mxu0 %v513
    %553 = vmatmul.bf16.gmra.mxu0 %v440
    %v554 = vpop.f32.mrf.mxu0
    %v555 = vadd.f32 %v461, %v554
    %v556 = vpop.f32.mrf.mxu0
    %557 = vdwg.mxu0
    %558 = vmatpush.bf16.msra.mxu0 %v528
    %559 = vmatpush.bf16.msra.mxu0 %v526
    %560 = vmatpush.bf16.msra.mxu0 %v524
    %561 = vmatpush.bf16.msra.mxu0 %v522
    %562 = vmatpush.bf16.msra.mxu0 %v520
    %563 = vmatpush.bf16.msra.mxu0 %v518
    %564 = vmatpush.bf16.msra.mxu0 %v516
    %565 = vmatpush.bf16.msra.mxu0 %v514
    %566 = vmatmul.bf16.gmra.mxu0 %v440
    %v567 = vpop.f32.mrf.mxu0
    %v568 = vadd.f32 %v462, %v567
    %v569 = vpop.f32.mrf.mxu0
    %570 = vdwg.mxu0
    %v571 = vmax.f32 %v555, 0.0
    %v572 = vpack.c.bf16 %v571, %v571
    %s573 = scalar_lea.vmem [#allocation11], 64
    %v574 = vld [vmem:[%s573] sm:$0xf]
    %v575 = vld [vmem:[%s573 + $0x4] sm:$0xf]
    %v576 = vld [vmem:[%s573 + $0x8] sm:$0xf]
    %v577 = vld [vmem:[%s573 + $0xc] sm:$0xf]
    %v578 = vld [vmem:[%s573 + $0x10] sm:$0xf]
    %v579 = vld [vmem:[%s573 + $0x14] sm:$0xf]
    %v580 = vld [vmem:[%s573 + $0x18] sm:$0xf]
    %v581 = vld [vmem:[%s573 + $0x1c] sm:$0xf]
    %v582 = vld [vmem:[%s573 + $0x20] sm:$0xf]
    %v583 = vld [vmem:[%s573 + $0x24] sm:$0xf]
    %v584 = vld [vmem:[%s573 + $0x28] sm:$0xf]
    %v585 = vld [vmem:[%s573 + $0x2c] sm:$0xf]
    %v586 = vld [vmem:[%s573 + $0x30] sm:$0xf]
    %v587 = vld [vmem:[%s573 + $0x34] sm:$0xf]
    %v588 = vld [vmem:[%s573 + $0x38] sm:$0xf]
    %v589 = vld [vmem:[%s573 + $0x3c] sm:$0xf]
    %v590 = vld [vmem:[%s6 + $0x1] sm:$0x1]
    %v591 = vperm.slane %v590, 0
    %v608 = vunpack.c.l.b16 %v574
    %v609 = vunpack.c.l.b16 %v575
    %v610 = vunpack.c.l.b16 %v576
    %v611 = vunpack.c.l.b16 %v577
    %v612 = vunpack.c.l.b16 %v578
    %v613 = vunpack.c.l.b16 %v579
    %v614 = vunpack.c.l.b16 %v580
    %v615 = vunpack.c.l.b16 %v581
    %v616 = vunpack.c.l.b16 %v582
    %v617 = vunpack.c.l.b16 %v583
    %v618 = vunpack.c.l.b16 %v584
    %v619 = vunpack.c.l.b16 %v585
    %v620 = vunpack.c.l.b16 %v586
    %v621 = vunpack.c.l.b16 %v587
    %v622 = vunpack.c.l.b16 %v588
    %v623 = vunpack.c.l.b16 %v589
    %v624 = vpack.c.b16 %v609, %v608
    %v625 = vpack.c.b16 %v611, %v610
    %v626 = vpack.c.b16 %v613, %v612
    %v627 = vpack.c.b16 %v615, %v614
    %v628 = vpack.c.b16 %v617, %v616
    %v629 = vpack.c.b16 %v619, %v618
    %v630 = vpack.c.b16 %v621, %v620
    %v631 = vpack.c.b16 %v623, %v622
    %640 = vmatpush.bf16.msra.mxu0 %v631
    %641 = vmatpush.bf16.msra.mxu0 %v630
    %642 = vmatpush.bf16.msra.mxu0 %v629
    %643 = vmatpush.bf16.msra.mxu0 %v628
    %644 = vmatpush.bf16.msra.mxu0 %v627
    %645 = vmatpush.bf16.msra.mxu0 %v626
    %646 = vmatpush.bf16.msra.mxu0 %v625
    %647 = vmatpush.bf16.msra.mxu0 %v624
    %648 = vmatmul.bf16.gmra.mxu0 %v572
    %v649 = vpop.f32.mrf.mxu0
    %v650 = vadd.f32 %v591, %v649
    %v651 = vpop.f32.mrf.mxu0
    %652 = vdwg.mxu0
    %v653 = vadd.f32 %v650, %v568
    %v654 = vld [vmem:[%s7 + $0x1] sm:$0x1]
    %v655 = vld [vmem:[%s8 + $0x1] sm:$0x1]
    %656 = vadd.xlane.f32.xlu0 %v653
    %v657 = vpop.xlane.xlu0 %656
    %v658 = vmul.f32 %v657, 0.03125
    %v659 = vsub.f32 %v653, %v658
    %v660 = vsel %vm418, %v659, 0.0
    %v661 = vmul.f32 %v660, %v660
    %662 = vadd.xlane.f32.xlu0 %v661
    %v663 = vpop.xlane.xlu0 %662
    %v664 = vmul.f32 %v663, 0.03125
    %v665 = vadd.f32 %v664, 1e-05
    %v666 = vrsqrt.pop %v665
    %v667 = vmul.f32 %v666, %v665
    %v668 = vmul.f32 %v667, %v666
    %v669 = vmul.f32 0.5, %v668
    %v670 = vsub.f32 1.5, %v669
    %v671 = vmul.f32 %v666, %v670
    %vm672 = vweird.f32 %v665
    %vm673 = vweird.f32 %v666
    %vm674 = vmor %vm672, %vm673
    %v675 = vsel %vm674, %v666, %v671
    %v676 = vmul.f32 %v660, %v675
    %v677 = vperm.slane %v654, 0
    %v678 = vmul.f32 %v676, %v677
    %v679 = vperm.slane %v655, 0
    %v680 = vadd.f32 %v678, %v679
    %v681 = vpack.c.bf16 %v680, %v680
    %v682 = vld [vmem:[#allocation13] sm:$0xf]
    %v683 = vld [vmem:[#allocation13 + $0x4] sm:$0xf]
    %v684 = vld [vmem:[#allocation13 + $0x8] sm:$0xf]
    %v685 = vld [vmem:[#allocation13 + $0xc] sm:$0xf]
    %v686 = vld [vmem:[#allocation13 + $0x10] sm:$0xf]
    %v687 = vld [vmem:[#allocation13 + $0x14] sm:$0xf]
    %v688 = vld [vmem:[#allocation13 + $0x18] sm:$0xf]
    %v689 = vld [vmem:[#allocation13 + $0x1c] sm:$0xf]
    %v690 = vld [vmem:[#allocation13 + $0x20] sm:$0xf]
    %v691 = vld [vmem:[#allocation13 + $0x24] sm:$0xf]
    %v692 = vld [vmem:[#allocation13 + $0x28] sm:$0xf]
    %v693 = vld [vmem:[#allocation13 + $0x2c] sm:$0xf]
    %v694 = vld [vmem:[#allocation13 + $0x30] sm:$0xf]
    %v695 = vld [vmem:[#allocation13 + $0x34] sm:$0xf]
    %v696 = vld [vmem:[#allocation13 + $0x38] sm:$0xf]
    %v697 = vld [vmem:[#allocation13 + $0x3c] sm:$0xf]
    %v698 = vld [vmem:[%s10] sm:$0x1]
    %v700 = vperm.slane %v698, 0
    %v718 = vunpack.c.l.b16 %v682
    %v719 = vunpack.c.l.b16 %v683
    %v720 = vunpack.c.l.b16 %v684
    %v721 = vunpack.c.l.b16 %v685
    %v722 = vunpack.c.l.b16 %v686
    %v723 = vunpack.c.l.b16 %v687
    %v724 = vunpack.c.l.b16 %v688
    %v725 = vunpack.c.l.b16 %v689
    %v726 = vunpack.c.l.b16 %v690
    %v727 = vunpack.c.l.b16 %v691
    %v728 = vunpack.c.l.b16 %v692
    %v729 = vunpack.c.l.b16 %v693
    %v730 = vunpack.c.l.b16 %v694
    %v731 = vunpack.c.l.b16 %v695
    %v732 = vunpack.c.l.b16 %v696
    %v733 = vunpack.c.l.b16 %v697
    %v734 = vpack.c.b16 %v719, %v718
    %v735 = vpack.c.b16 %v721, %v720
    %v736 = vpack.c.b16 %v723, %v722
    %v737 = vpack.c.b16 %v725, %v724
    %v738 = vpack.c.b16 %v727, %v726
    %v739 = vpack.c.b16 %v729, %v728
    %v740 = vpack.c.b16 %v731, %v730
    %v741 = vpack.c.b16 %v733, %v732
    %750 = vmatpush.bf16.msra.mxu0 %v741
    %751 = vmatpush.bf16.msra.mxu0 %v740
    %752 = vmatpush.bf16.msra.mxu0 %v739
    %753 = vmatpush.bf16.msra.mxu0 %v738
    %754 = vmatpush.bf16.msra.mxu0 %v737
    %755 = vmatpush.bf16.msra.mxu0 %v736
    %756 = vmatpush.bf16.msra.mxu0 %v735
    %757 = vmatpush.bf16.msra.mxu0 %v734
    %758 = vmatmul.bf16.gmra.mxu0 %v681
    %v759 = vpop.f32.mrf.mxu0
    %v760 = vadd.f32 %v700, %v759
    %v761 = vpop.f32.mrf.mxu0
    %762 = vdwg.mxu0
    %763 = vst [vmem:[#allocation14] sm:$0xff] %v760
    // Predicated region
    $region74: #{tpu_custom_call.1} parent=1 // pred_check
      _
    $region75: #{tpu_custom_call.1} parent=1 // pred_check_branch
      %765 = sbr.rel (0) target = $region77
    $region76: #{tpu_custom_call.1} parent=1 // pred_region
      %767 = vsyncadd [#allocation4], 96
      %s768 = sshll.u32 [#allocation14], 4
      %s769 = int_to_ptr.vmem [resolvable:$true] %s768
      %s770 = sshll.u32 %s11, 4
      %s771 = int_to_ptr.hbm [resolvable:$true] %s770
      %776 = dma.vmem_to_hbm [thread:$0]  %s769, 32, %s771, [#allocation4], 32, 32, 2
    $region77: #{tpu_custom_call.1} parent=1 // pred_fallthru
      _
    // Predicated region
    $region78: #{tpu_custom_call.1} parent=1 // pred_check
      _
    $region79: #{tpu_custom_call.1} parent=1 // pred_check_branch
      %778 = sbr.rel (0) target = $region81
    $region80: #{tpu_custom_call.1} parent=1 // pred_region
      %780 = dma.done [#allocation4], 128
    $region81: #{tpu_custom_call.1} parent=1 // pred_fallthru
      _
    %781 = vsyncpa [#allocation3], 1
    %782 = vsyncpa [#allocation6], 1
    %783 = vsyncpa [#allocation9], 1
    %784 = vsyncpa [#allocation12], 1
    %785 = vsyncpa [#allocation4], 1

</llo_original>
